<compile_context>
chip_gen: v6e
topology: v6e:2x2x1
jax: 0.10.0
libtpu: 0.0.40
codegen_flags: <defaults>
</compile_context>

<pallas_src>
import functools

import jax
import jax.numpy as jnp
from jax.experimental import pallas as pl
from jax.experimental.pallas import tpu as pltpu


def _round_up(n, m):
    return ((n + m - 1) // m) * m


def mlp_kernel(x_ref, w1_ref, b1_ref, w2_ref, b2_ref, o_ref):
    # x_ref:  (TB, K)   K = obs_size (tiny, e.g. 4)
    # w1_ref: (K, H)    b1_ref: (1, H)
    # w2_ref: (H, A)    b2_ref: (1, A)    o_ref: (TB, A)   (A = n_actions, unpadded)
    x = x_ref[...].astype(jnp.float32)
    k_dim = x_ref.shape[1]

    # ---- Layer 1: unrolled VPU broadcast-FMA over the tiny contraction ----
    # TODO(synk): if the bundle dump shows VALU as the binding slot here, move
    # this K=4 contraction onto the (otherwise idle) MXU instead.
    h = x[:, 0:1] * w1_ref[0:1, :]
    for k in range(1, k_dim):                       # static unroll (K is small)
        h = h + x[:, k:k + 1] * w1_ref[k:k + 1, :]
    h = jnp.maximum(h + b1_ref[...], 0.0)           # bias + ReLU on the VPU (f32)

    # ---- Layer 2: bf16 MXU matmul (full hidden contraction), f32 accumulate ----
    o = jnp.dot(h.astype(jnp.bfloat16),
                w2_ref[...].astype(jnp.bfloat16),
                preferred_element_type=jnp.float32)
    o = o + b2_ref[...]
    o_ref[...] = o.astype(o_ref.dtype)


@functools.partial(jax.jit, static_argnames=("tile_batch",))
def net_forward(x, w1, b1, w2, b2, *, tile_batch=1024):
    """Forward pass of Net for a whole batch in a single pallas_call.

    x:  [B, obs_size]
    w1: [obs_size, H]   b1: [1, H]
    w2: [H, A]          b2: [1, A]
    returns [B, A]
    """
    B, obs_size = x.shape
    H = w1.shape[1]
    A = w2.shape[1]

    # Batch tiling:
    #  * whole batch fits in one tile -> block dim equals the full array dim
    #    (no sublane-divisibility constraint, no padding, no boundary tile);
    #  * otherwise multiple-of-8 tile + cdiv grid; the ragged last tile is
    #    handled by Pallas (masked stores), so no jnp.pad / output slice.
    tb = max(8, _round_up(tile_batch, 8))
    if B <= tb:
        TB = B
        num_tiles = 1
    else:
        TB = tb
        num_tiles = pl.cdiv(B, TB)

    out = pl.pallas_call(
        mlp_kernel,
        out_shape=jax.ShapeDtypeStruct((B, A), x.dtype),
        grid=(num_tiles,),
        in_specs=[
            # Activations stream over the batch grid axis.
            pl.BlockSpec((TB, obs_size), lambda i: (i, 0)),
            # Weights/biases: constant block index -> stay resident in VMEM.
            pl.BlockSpec((obs_size, H), lambda i: (0, 0)),
            pl.BlockSpec((1, H), lambda i: (0, 0)),
            pl.BlockSpec((H, A), lambda i: (0, 0)),
            pl.BlockSpec((1, A), lambda i: (0, 0)),
        ],
        out_specs=pl.BlockSpec((TB, A), lambda i: (i, 0)),
        compiler_params=pltpu.CompilerParams(
            # TODO(synk): on v7x, confirm via xprof that the batch axis shards
            # across both TensorCores; if not, switch to pltpu.CORE_PARALLEL.
            dimension_semantics=("parallel",),
        ),
    )(x, w1, b1, w2, b2)

    return out


def init_params(key, obs_size, hidden_size, n_actions, dtype=jnp.float32):
    """Deterministic PyTorch-style (uniform +/- 1/sqrt(fan_in)) initialization."""
    k1, k2, k3, k4 = jax.random.split(key, 4)
    bound1 = 1.0 / jnp.sqrt(jnp.asarray(obs_size, dtype))
    bound2 = 1.0 / jnp.sqrt(jnp.asarray(hidden_size, dtype))
    w1 = jax.random.uniform(k1, (obs_size, hidden_size), dtype, -bound1, bound1)
    b1 = jax.random.uniform(k2, (1, hidden_size), dtype, -bound1, bound1)
    w2 = jax.random.uniform(k3, (hidden_size, n_actions), dtype, -bound2, bound2)
    b2 = jax.random.uniform(k4, (1, n_actions), dtype, -bound2, bound2)
    return w1, b1, w2, b2


def reference_forward(x, w1, b1, w2, b2):
    """Pure-f32 reference (PyTorch semantics)."""
    h = jnp.maximum(x @ w1 + b1, 0.0)
    return h @ w2 + b2


def reference_forward_bf16(x, w1, b1, w2, b2):
    """Reference matching the kernel's numerics (bf16 MXU inputs, f32 acc)."""
    h = jnp.maximum(x @ w1 + b1, 0.0)
    o = jnp.dot(h.astype(jnp.bfloat16), w2.astype(jnp.bfloat16),
                preferred_element_type=jnp.float32)
    return o + b2


def _check(out, x, params):
    ref_f32 = reference_forward(x, *params)
    ref_bf16 = reference_forward_bf16(x, *params)
    assert out.shape == ref_f32.shape
    # Loose check against the full-f32 reference (bf16 MXU inputs drift a bit).
    assert jnp.allclose(out, ref_f32, atol=3e-2, rtol=3e-2)
    # Tight check against the bf16-input / f32-accumulate reference.
    assert jnp.allclose(out, ref_bf16, atol=1e-3, rtol=1e-3)


if __name__ == "__main__":
    # CartPole-like sizes: obs_size=4, hidden_size=128, n_actions=2, batch=8
    batch, obs_size, hidden_size, n_actions = 8, 4, 128, 2

    key = jax.random.PRNGKey(0)
    kx, kp = jax.random.split(key)
    x = jax.random.normal(kx, (batch, obs_size), jnp.float32)
    params = init_params(kp, obs_size, hidden_size, n_actions)

    out = jax.block_until_ready(net_forward(x, *params))
    assert out.shape == (batch, n_actions)
    _check(out, x, params)

    # Rollout-sized batch, single full-dim tile (no padding, no boundary tile).
    x_big = jax.random.normal(jax.random.PRNGKey(1), (1000, obs_size), jnp.float32)
    out_big = jax.block_until_ready(net_forward(x_big, *params))
    _check(out_big, x_big, params)

    # Multi-tile grid that divides evenly (2048 rows / TB=512 -> 4 tiles).
    x_mt = jax.random.normal(jax.random.PRNGKey(2), (2048, obs_size), jnp.float32)
    out_mt = jax.block_until_ready(net_forward(x_mt, *params, tile_batch=512))
    _check(out_mt, x_mt, params)

    # Ragged last tile (1000 rows / TB=256 -> 4 tiles, last tile has 232 rows),
    # exercising Pallas boundary masking instead of wrapper-side padding.
    out_rag = jax.block_until_ready(net_forward(x_big, *params, tile_batch=256))
    _check(out_rag, x_big, params)

    print("KERNEL_OK")
</pallas_src>

<mosaic_0001>
module attributes {stable_mosaic.version = 11 : i64} {
  func.func @mlp_kernel(%arg0: i32, %arg1: memref<8x4xf32, #tpu.memory_space<vmem>>, %arg2: memref<4x128xf32, #tpu.memory_space<vmem>>, %arg3: memref<1x128xf32, #tpu.memory_space<vmem>>, %arg4: memref<128x2xf32, #tpu.memory_space<vmem>>, %arg5: memref<1x2xf32, #tpu.memory_space<vmem>>, %arg6: memref<8x2xf32, #tpu.memory_space<vmem>>) attributes {dimension_semantics = [#tpu.dimension_semantics<parallel>], iteration_bounds = array<i64: 1>, scalar_prefetch = 0 : i64, scratch_operands = 0 : i64, tpu.core_type = #tpu.core_type<tc>, window_params = [{transform_indices = @transform_0, window_bounds = array<i64: 8, 4>}, {pipeline_mode = #tpu.pipeline_mode<synchronous>, transform_indices = @transform_1, window_bounds = array<i64: 4, 128>}, {pipeline_mode = #tpu.pipeline_mode<synchronous>, transform_indices = @transform_2, window_bounds = array<i64: 1, 128>}, {pipeline_mode = #tpu.pipeline_mode<synchronous>, transform_indices = @transform_3, window_bounds = array<i64: 128, 2>}, {pipeline_mode = #tpu.pipeline_mode<synchronous>, transform_indices = @transform_4, window_bounds = array<i64: 1, 2>}, {transform_indices = @transform_5, window_bounds = array<i64: 8, 2>}]} {
    %c0 = arith.constant 0 : index
    %c0_0 = arith.constant 0 : index
    %0 = vector.load %arg1[%c0, %c0_0] : memref<8x4xf32, #tpu.memory_space<vmem>>, vector<8x4xf32>
    %1 = vector.extract_strided_slice %0 {offsets = [0, 0], sizes = [8, 1], strides = [1, 1]} : vector<8x4xf32> to vector<8x1xf32>
    %c0_1 = arith.constant 0 : index
    %c0_2 = arith.constant 0 : index
    %2 = vector.load %arg2[%c0_1, %c0_2] : memref<4x128xf32, #tpu.memory_space<vmem>>, vector<1x128xf32>
    %3 = vector.broadcast %1 : vector<8x1xf32> to vector<8x128xf32>
    %4 = vector.broadcast %2 : vector<1x128xf32> to vector<8x128xf32>
    %5 = arith.mulf %3, %4 : vector<8x128xf32>
    %6 = vector.extract_strided_slice %0 {offsets = [0, 1], sizes = [8, 1], strides = [1, 1]} : vector<8x4xf32> to vector<8x1xf32>
    %c1 = arith.constant 1 : index
    %c0_3 = arith.constant 0 : index
    %7 = vector.load %arg2[%c1, %c0_3] : memref<4x128xf32, #tpu.memory_space<vmem>>, vector<1x128xf32>
    %8 = vector.broadcast %6 : vector<8x1xf32> to vector<8x128xf32>
    %9 = vector.broadcast %7 : vector<1x128xf32> to vector<8x128xf32>
    %10 = arith.mulf %8, %9 : vector<8x128xf32>
    %11 = arith.addf %5, %10 : vector<8x128xf32>
    %12 = vector.extract_strided_slice %0 {offsets = [0, 2], sizes = [8, 1], strides = [1, 1]} : vector<8x4xf32> to vector<8x1xf32>
    %c2 = arith.constant 2 : index
    %c0_4 = arith.constant 0 : index
    %13 = vector.load %arg2[%c2, %c0_4] : memref<4x128xf32, #tpu.memory_space<vmem>>, vector<1x128xf32>
    %14 = vector.broadcast %12 : vector<8x1xf32> to vector<8x128xf32>
    %15 = vector.broadcast %13 : vector<1x128xf32> to vector<8x128xf32>
    %16 = arith.mulf %14, %15 : vector<8x128xf32>
    %17 = arith.addf %11, %16 : vector<8x128xf32>
    %18 = vector.extract_strided_slice %0 {offsets = [0, 3], sizes = [8, 1], strides = [1, 1]} : vector<8x4xf32> to vector<8x1xf32>
    %c3 = arith.constant 3 : index
    %c0_5 = arith.constant 0 : index
    %19 = vector.load %arg2[%c3, %c0_5] : memref<4x128xf32, #tpu.memory_space<vmem>>, vector<1x128xf32>
    %20 = vector.broadcast %18 : vector<8x1xf32> to vector<8x128xf32>
    %21 = vector.broadcast %19 : vector<1x128xf32> to vector<8x128xf32>
    %22 = arith.mulf %20, %21 : vector<8x128xf32>
    %23 = arith.addf %17, %22 : vector<8x128xf32>
    %c0_6 = arith.constant 0 : index
    %c0_7 = arith.constant 0 : index
    %24 = vector.load %arg3[%c0_6, %c0_7] : memref<1x128xf32, #tpu.memory_space<vmem>>, vector<1x128xf32>
    %25 = vector.broadcast %24 : vector<1x128xf32> to vector<8x128xf32>
    %26 = arith.addf %23, %25 : vector<8x128xf32>
    %cst = arith.constant 0.000000e+00 : f32
    %27 = vector.broadcast %cst : f32 to vector<8x128xf32>
    %28 = arith.maximumf %26, %27 : vector<8x128xf32>
    %29 = arith.truncf %28 : vector<8x128xf32> to vector<8x128xbf16>
    %c0_8 = arith.constant 0 : index
    %c0_9 = arith.constant 0 : index
    %30 = vector.load %arg4[%c0_8, %c0_9] : memref<128x2xf32, #tpu.memory_space<vmem>>, vector<128x2xf32>
    %31 = arith.truncf %30 : vector<128x2xf32> to vector<128x2xbf16>
    %cst_10 = arith.constant dense<0.000000e+00> : vector<8x2xf32>
    %32 = tpu.matmul %29, %31, %cst_10 {dimension_numbers = #tpu.dot_dimension_numbers<[1], [0], [0], [1], [0, 0, 1, 1], [], []>} : vector<8x128xbf16>, vector<128x2xbf16>, vector<8x2xf32> -> vector<8x2xf32>
    %c0_11 = arith.constant 0 : index
    %c0_12 = arith.constant 0 : index
    %33 = vector.load %arg5[%c0_11, %c0_12] : memref<1x2xf32, #tpu.memory_space<vmem>>, vector<1x2xf32>
    %34 = vector.broadcast %33 : vector<1x2xf32> to vector<8x2xf32>
    %35 = arith.addf %32, %34 : vector<8x2xf32>
    %c0_13 = arith.constant 0 : index
    %c0_14 = arith.constant 0 : index
    %36 = vector.load %arg6[%c0_13, %c0_14] : memref<8x2xf32, #tpu.memory_space<vmem>>, vector<8x2xf32>
    tpu.vector_store %arg6[%c0_13, %c0_14], %35 {strides = array<i32>} : memref<8x2xf32, #tpu.memory_space<vmem>>, vector<8x2xf32>,
    return
  }
  func.func @transform_0(%arg0: i32) -> (i32, i32) {
    %c0_i32 = arith.constant 0 : i32
    %c0_i32_0 = arith.constant 0 : i32
    return %arg0, %c0_i32 : i32, i32
  }
  func.func @transform_1(%arg0: i32) -> (i32, i32) {
    %c0_i32 = arith.constant 0 : i32
    %c0_i32_0 = arith.constant 0 : i32
    %c0_i32_1 = arith.constant 0 : i32
    return %c0_i32, %c0_i32_0 : i32, i32
  }
  func.func @transform_2(%arg0: i32) -> (i32, i32) {
    %c0_i32 = arith.constant 0 : i32
    %c0_i32_0 = arith.constant 0 : i32
    %c0_i32_1 = arith.constant 0 : i32
    return %c0_i32, %c0_i32_0 : i32, i32
  }
  func.func @transform_3(%arg0: i32) -> (i32, i32) {
    %c0_i32 = arith.constant 0 : i32
    %c0_i32_0 = arith.constant 0 : i32
    %c0_i32_1 = arith.constant 0 : i32
    return %c0_i32, %c0_i32_0 : i32, i32
  }
  func.func @transform_4(%arg0: i32) -> (i32, i32) {
    %c0_i32 = arith.constant 0 : i32
    %c0_i32_0 = arith.constant 0 : i32
    %c0_i32_1 = arith.constant 0 : i32
    return %c0_i32, %c0_i32_0 : i32, i32
  }
  func.func @transform_5(%arg0: i32) -> (i32, i32) {
    %c0_i32 = arith.constant 0 : i32
    %c0_i32_0 = arith.constant 0 : i32
    return %arg0, %c0_i32 : i32, i32
  }
}

</mosaic_0001>

<llo_original>
// kernel: net_forward.1
$region0: #{net_forward.1}
  #allocation0 [shape = 'u32[]', space=smem, size = 0x4, offset = 0x4, fixed_abs, tag = 'smem constant byte address 0x4 - core index']
  #allocation1 [shape = 'u32[144,128]{1,0:T(1,128)}', space=vmem, size = 0x12000, scoped, tag = 'internal scratch']
  %s0 = inlined_call_operand.vmem [shape: f32[8,4], index: 0, kind: input, shape index: {}]
  %s1 = inlined_call_operand.vmem [shape: f32[4,128], index: 1, kind: input, shape index: {}]
  %s2 = inlined_call_operand.vmem [shape: f32[1,128], index: 2, kind: input, shape index: {}]
  %s3 = inlined_call_operand.vmem [shape: f32[128,2], index: 3, kind: input, shape index: {}]
  %s4 = inlined_call_operand.vmem [shape: f32[1,2], index: 4, kind: input, shape index: {}]
  %s5 = inlined_call_operand.vmem [shape: f32[8,2], index: 5, kind: output, shape index: {}]
  %s6 = sld [smem:[#allocation0]]
  $region30: #{net_forward.1} parent=0
    _
  %s8 = ssub.s32 1, %s6
  %s9 = scalar_select 0, %s8, %s6
  // Predicated region
  $region2: #{net_forward.1} parent=0 // pred_check
    _
  $region3: #{net_forward.1} parent=0 // pred_check_branch
    %11 = sbr.rel (0) target = $region5
  $region4: #{net_forward.1} parent=0 // pred_region
    _
  $region5: #{net_forward.1} parent=0 // pred_fallthru
    _
  // Predicated region
  $region6: #{net_forward.1} parent=0 // pred_check
    _
  $region7: #{net_forward.1} parent=0 // pred_check_branch
    %13 = sbr.rel (0) target = $region9
  $region8: #{net_forward.1} parent=0 // pred_region
    _
  $region9: #{net_forward.1} parent=0 // pred_fallthru
    _
  // Predicated region
  $region10: #{net_forward.1} parent=0 // pred_check
    _
  $region11: #{net_forward.1} parent=0 // pred_check_branch
    %15 = sbr.rel (0) target = $region13
  $region12: #{net_forward.1} parent=0 // pred_region
    _
  $region13: #{net_forward.1} parent=0 // pred_fallthru
    _
  // Predicated region
  $region14: #{net_forward.1} parent=0 // pred_check
    _
  $region15: #{net_forward.1} parent=0 // pred_check_branch
    %17 = sbr.rel (0) target = $region17
  $region16: #{net_forward.1} parent=0 // pred_region
    _
  $region17: #{net_forward.1} parent=0 // pred_fallthru
    _
  // Predicated region
  $region18: #{net_forward.1} parent=0 // pred_check
    _
  $region19: #{net_forward.1} parent=0 // pred_check_branch
    %19 = sbr.rel (0) target = $region21
  $region20: #{net_forward.1} parent=0 // pred_region
    _
  $region21: #{net_forward.1} parent=0 // pred_fallthru
    _
  %v21 = vld [vmem:[%s0] sm:$0xff]
  %v22 = vld [vmem:[%s1] sm:$0x1]
  %24 = vset.pattern.permute.xlu0 0
  %25 = vperm.xlu0 %24, %v21
  %v26 = vpop.permute.xlu0 %25
  %v28 = vlaneseq
  %v29 = vshrl.u32 %v28, 7
  %v30 = vsub.s32 0, %v29
  %v31 = vrot.slane %v22, %v30
  %v32 = vmul.f32 %v26, %v31
  %v33 = vld [vmem:[%s1 + $0x1] sm:$0x1]
  %34 = vset.pattern.permute.xlu0 1
  %35 = vperm.xlu0 %34, %v21
  %v36 = vpop.permute.xlu0 %35
  %v38 = vlaneseq
  %v39 = vshrl.u32 %v38, 7
  %v40 = vsub.s32 0, %v39
  %v41 = vrot.slane %v33, %v40
  %v42 = vmul.f32 %v36, %v41
  %v43 = vadd.f32 %v32, %v42
  %v44 = vld [vmem:[%s1 + $0x2] sm:$0x1]
  %45 = vset.pattern.permute.xlu0 2
  %46 = vperm.xlu0 %45, %v21
  %v47 = vpop.permute.xlu0 %46
  %v49 = vlaneseq
  %v50 = vshrl.u32 %v49, 7
  %v51 = vsub.s32 0, %v50
  %v52 = vrot.slane %v44, %v51
  %v53 = vmul.f32 %v47, %v52
  %v54 = vadd.f32 %v43, %v53
  %v55 = vld [vmem:[%s1 + $0x3] sm:$0x1]
  %56 = vset.pattern.permute.xlu0 3
  %57 = vperm.xlu0 %56, %v21
  %v58 = vpop.permute.xlu0 %57
  %v60 = vlaneseq
  %v61 = vshrl.u32 %v60, 7
  %v62 = vsub.s32 0, %v61
  %v63 = vrot.slane %v55, %v62
  %v64 = vmul.f32 %v58, %v63
  %v65 = vadd.f32 %v54, %v64
  %v66 = vld [vmem:[%s2] sm:$0x1]
  %v68 = vlaneseq
  %v69 = vshrl.u32 %v68, 7
  %v70 = vsub.s32 0, %v69
  %v71 = vrot.slane %v66, %v70
  %v73 = vadd.f32 %v65, %v71
  %v74 = vmax.f32 %v73, 0.0
  %v75 = vpack.c.bf16 %v74, %v74
  %v76 = vld [vmem:[%s3] sm:$0xff]
  %v77 = vld [vmem:[%s3 + $0x8] sm:$0xff]
  %v78 = vld [vmem:[%s3 + $0x10] sm:$0xff]
  %v79 = vld [vmem:[%s3 + $0x18] sm:$0xff]
  %v80 = vld [vmem:[%s3 + $0x20] sm:$0xff]
  %v81 = vld [vmem:[%s3 + $0x28] sm:$0xff]
  %v82 = vld [vmem:[%s3 + $0x30] sm:$0xff]
  %v83 = vld [vmem:[%s3 + $0x38] sm:$0xff]
  %v84 = vld [vmem:[%s3 + $0x40] sm:$0xff]
  %v85 = vld [vmem:[%s3 + $0x48] sm:$0xff]
  %v86 = vld [vmem:[%s3 + $0x50] sm:$0xff]
  %v87 = vld [vmem:[%s3 + $0x58] sm:$0xff]
  %v88 = vld [vmem:[%s3 + $0x60] sm:$0xff]
  %v89 = vld [vmem:[%s3 + $0x68] sm:$0xff]
  %v90 = vld [vmem:[%s3 + $0x70] sm:$0xff]
  %v91 = vld [vmem:[%s3 + $0x78] sm:$0xff]
  %v92 = vpack.c.bf16 %v77, %v76
  %v93 = vpack.c.bf16 %v79, %v78
  %v94 = vpack.c.bf16 %v81, %v80
  %v95 = vpack.c.bf16 %v83, %v82
  %v96 = vpack.c.bf16 %v85, %v84
  %v97 = vpack.c.bf16 %v87, %v86
  %v98 = vpack.c.bf16 %v89, %v88
  %v99 = vpack.c.bf16 %v91, %v90
  %v100 = vld [vmem:[%s4] sm:$0x1]
  %v102 = vlaneseq
  %v103 = vshrl.u32 %v102, 7
  %v104 = vsub.s32 0, %v103
  %v105 = vrot.slane %v100, %v104
  %107 = vmatprep.subr.bf16.mxu0 0
  %108 = vmatpush1.bf16.msra.mxu0 %v99
  %109 = vmatprep.subr.bf16.mxu0 0
  %110 = vmatpush1.bf16.msra.mxu0 %v98
  %111 = vmatprep.subr.bf16.mxu0 0
  %112 = vmatpush1.bf16.msra.mxu0 %v97
  %113 = vmatprep.subr.bf16.mxu0 0
  %114 = vmatpush1.bf16.msra.mxu0 %v96
  %115 = vmatprep.subr.bf16.mxu0 0
  %116 = vmatpush1.bf16.msra.mxu0 %v95
  %117 = vmatprep.subr.bf16.mxu0 0
  %118 = vmatpush1.bf16.msra.mxu0 %v94
  %119 = vmatprep.subr.bf16.mxu0 0
  %120 = vmatpush1.bf16.msra.mxu0 %v93
  %121 = vmatprep.subr.bf16.mxu0 0
  %122 = vmatpush1.bf16.msra.mxu0 %v92
  %123 = vmatprep.subr.bf16.mxu0 0
  %124 = vmatpush2.bf16.msra.mxu0 0
  %125 = vmatprep.subr.bf16.mxu0 0
  %126 = vmatpush2.bf16.msra.mxu0 0
  %127 = vmatprep.subr.bf16.mxu0 0
  %128 = vmatpush2.bf16.msra.mxu0 0
  %129 = vmatprep.subr.bf16.mxu0 0
  %130 = vmatpush2.bf16.msra.mxu0 0
  %131 = vmatprep.subr.bf16.mxu0 0
  %132 = vmatpush2.bf16.msra.mxu0 0
  %133 = vmatprep.subr.bf16.mxu0 0
  %134 = vmatpush2.bf16.msra.mxu0 0
  %135 = vmatprep.subr.bf16.mxu0 0
  %136 = vmatpush2.bf16.msra.mxu0 0
  %137 = vmatprep.subr.bf16.mxu0 0
  %138 = vmatpush2.bf16.msra.mxu0 0
  %139 = vmatprep.mubr.bf16.mxu0 0
  %140 = vmatmul.mubr.bf16.gmra.mxu0 %v75
  %v141 = vpop.f32.mrf.mxu0
  %v142 = vadd.f32 %v105, %v141
  %v143 = vpop.f32.mrf.mxu0
  %v144 = vpop.f32.mrf.mxu0
  %v145 = vpop.f32.mrf.mxu0
  %146 = vdwg.mxu0
  %vm147 = vcmask 15360
  %148 = vst.msk [vmem:[%s5] sm:$0xff] %vm147, %v142
  // Predicated region
  $region22: #{net_forward.1} parent=0 // pred_check
    _
  $region23: #{net_forward.1} parent=0 // pred_check_branch
    %150 = sbr.rel (0) target = $region25
  $region24: #{net_forward.1} parent=0 // pred_region
    _
  $region25: #{net_forward.1} parent=0 // pred_fallthru
    _
  // Predicated region
  $region26: #{net_forward.1} parent=0 // pred_check
    _
  $region27: #{net_forward.1} parent=0 // pred_check_branch
    %152 = sbr.rel (0) target = $region29
  $region28: #{net_forward.1} parent=0 // pred_region
    _
  $region29: #{net_forward.1} parent=0 // pred_fallthru
    _

</llo_original>
